<compile_context>
chip_gen: v5e
topology: v5e:2x2
jax: 0.10.0
libtpu: 0.0.40
codegen_flags: <defaults>
</compile_context>

<pallas_src>
import functools

import jax
import jax.numpy as jnp
from jax import lax
from jax.experimental import pallas as pl
from jax.experimental.pallas import tpu as pltpu


def _pointer_net_kernel(*refs, affine, batch, tgt_len):
    if affine:
        src_ref, q_ref, bias_ref, w_ref, out_ref = refs
    else:
        src_ref, q_ref, bias_ref, out_ref = refs

    # Fused projection for all batches/timesteps: (B*T, Q) @ (Q, H) -> (B*T, H).
    q_all = q_ref[...]
    if affine:
        qw_all = lax.dot_general(q_all, w_ref[...],
                                 (((1,), (0,)), ((), ())),
                                 preferred_element_type=jnp.float32)
    else:
        qw_all = q_all                                   # dot_prod: H == Q

    for b in range(batch):                               # tiny static loop, unrolled
        # Sublane-aligned leading-dim slices only (T is a multiple-of-8-friendly 8).
        qw_b = qw_all[b * tgt_len:(b + 1) * tgt_len, :]  # (T, H)
        src_b = src_ref[b]                               # (S, H)
        scores = lax.dot_general(qw_b, src_b,
                                 (((1,), (1,)), ((), ())),
                                 preferred_element_type=jnp.float32)   # (T, S)
        scores = scores + bias_ref[pl.ds(b, 1), :]       # additive mask bias (1, S)

        m = jnp.max(scores, axis=-1, keepdims=True)
        p = jnp.exp(scores - m)
        denom = jnp.sum(p, axis=-1, keepdims=True)
        # One dense (T, S) slab store per batch element.
        out_ref[b] = (p * pl.reciprocal(denom, approx=True)).astype(out_ref.dtype)


def pointer_net_forward(src_encodings, src_token_mask, query_vec, w=None,
                        attention_type="affine"):
    """
    src_encodings : (B, S, H) float32
    src_token_mask: (B, S)    bool (True == masked/pad) or None
    query_vec     : (T, B, Q) float32
    w             : (Q, H)    float32 affine weight (ignored for dot_prod)
    returns       : (T, B, S) float32 softmax pointer weights
    """
    assert attention_type in ("affine", "dot_prod")
    affine = attention_type == "affine"
    B, S, H = src_encodings.shape
    T, Bq, Q = query_vec.shape
    assert Bq == B
    if affine:
        assert w is not None and w.shape == (Q, H)
    else:
        assert H == Q, "dot_prod attention requires src_encoding_size == query_vec_size"

    # Wrapper-side layout plumbing (cheap XLA ops) so the kernel sees dense slabs.
    q_flat = jnp.transpose(query_vec, (1, 0, 2)).reshape(B * T, Q)     # (B*T, Q)

    # Additive mask bias: finite large-negative instead of -inf (no NaN rows).
    if src_token_mask is None:
        bias = jnp.zeros((B, S), dtype=jnp.float32)
    else:
        bias = src_token_mask.astype(jnp.float32) * jnp.float32(-1e30)  # (B, S)

    arrays = [src_encodings.astype(jnp.float32),
              q_flat.astype(jnp.float32),
              bias]
    if affine:
        arrays.append(w.astype(jnp.float32))

    kernel = functools.partial(_pointer_net_kernel,
                               affine=affine, batch=B, tgt_len=T)

    vmem_spec = pl.BlockSpec(memory_space=pltpu.MemorySpace.VMEM)
    out_bts = pl.pallas_call(
        kernel,
        out_shape=jax.ShapeDtypeStruct((B, T, S), jnp.float32),
        in_specs=[vmem_spec] * len(arrays),
        out_specs=vmem_spec,
    )(*arrays)

    # Back to the module's (T, B, S) contract.
    return jnp.transpose(out_bts, (1, 0, 2))


def pointer_net_reference(src_encodings, src_token_mask, query_vec, w,
                          attention_type="affine"):
    """Pure-JAX reference mirroring the PyTorch forward."""
    if attention_type == "affine":
        proj = jnp.einsum("bsh,qh->bsq", src_encodings, w)        # (B, S, Q)
    else:
        proj = src_encodings
    scores = jnp.einsum("bsq,tbq->tbs", proj, query_vec)          # (T, B, S)
    if src_token_mask is not None:
        scores = jnp.where(src_token_mask[None, :, :], -jnp.inf, scores)
    return jax.nn.softmax(scores, axis=-1)


if __name__ == "__main__":
    # Shapes consistent with the module: batch B=2, src_len S=16,
    # src_encoding_size H=48 (hidden*2), query_vec_size Q=32, tgt_action_num T=8
    B, S, H, Q, T = 2, 16, 48, 32, 8

    key = jax.random.PRNGKey(0)
    k1, k2, k3, k4 = jax.random.split(key, 4)

    src_encodings = jax.random.normal(k1, (B, S, H), dtype=jnp.float32)
    query_vec = jax.random.normal(k2, (T, B, Q), dtype=jnp.float32)
    w = (jax.random.normal(k3, (Q, H), dtype=jnp.float32) / jnp.sqrt(H)).astype(jnp.float32)

    # Deterministic mask: batch 0 has 12 valid tokens, batch 1 has 9 (True == masked/pad)
    lens = jnp.array([12, 9], dtype=jnp.int32)
    src_token_mask = jnp.arange(S)[None, :] >= lens[:, None]      # (B, S) bool

    # --- affine path ---
    out = pointer_net_forward(src_encodings, src_token_mask, query_vec, w,
                              attention_type="affine")
    out = jax.block_until_ready(out)
    ref = pointer_net_reference(src_encodings, src_token_mask, query_vec, w,
                                attention_type="affine")
    assert out.shape == (T, B, S)
    assert jnp.allclose(out, ref, atol=2e-3, rtol=2e-3), "affine mismatch vs reference"

    # --- dot_prod path (requires H == Q): projection matmul is skipped entirely ---
    src_dp = jax.random.normal(k4, (B, S, Q), dtype=jnp.float32)
    out_dp = pointer_net_forward(src_dp, src_token_mask, query_vec, None,
                                 attention_type="dot_prod")
    out_dp = jax.block_until_ready(out_dp)
    ref_dp = pointer_net_reference(src_dp, src_token_mask, query_vec, None,
                                   attention_type="dot_prod")
    assert out_dp.shape == (T, B, S)
    assert jnp.allclose(out_dp, ref_dp, atol=2e-3, rtol=2e-3), "dot_prod mismatch vs reference"

    print("KERNEL_OK")
</pallas_src>

<mosaic_0001>
module attributes {stable_mosaic.version = 11 : i64} {
  func.func @_pointer_net_kernel(%arg0: memref<2x16x48xf32, #tpu.memory_space<vmem>>, %arg1: memref<16x32xf32, #tpu.memory_space<vmem>>, %arg2: memref<2x16xf32, #tpu.memory_space<vmem>>, %arg3: memref<32x48xf32, #tpu.memory_space<vmem>>, %arg4: memref<2x8x16xf32, #tpu.memory_space<vmem>>) attributes {dimension_semantics = [], scalar_prefetch = 0 : i64, scratch_operands = 0 : i64, tpu.core_type = #tpu.core_type<tc>} {
    %c0 = arith.constant 0 : index
    %c0_0 = arith.constant 0 : index
    %0 = vector.load %arg1[%c0, %c0_0] : memref<16x32xf32, #tpu.memory_space<vmem>>, vector<16x32xf32>
    %c0_1 = arith.constant 0 : index
    %c0_2 = arith.constant 0 : index
    %1 = vector.load %arg3[%c0_1, %c0_2] : memref<32x48xf32, #tpu.memory_space<vmem>>, vector<32x48xf32>
    %cst = arith.constant dense<0.000000e+00> : vector<16x48xf32>
    %2 = tpu.matmul %0, %1, %cst {dimension_numbers = #tpu.dot_dimension_numbers<[1], [0], [0], [1], [0, 0, 1, 1], [], []>} : vector<16x32xf32>, vector<32x48xf32>, vector<16x48xf32> -> vector<16x48xf32>
    %3 = vector.extract_strided_slice %2 {offsets = [0, 0], sizes = [8, 48], strides = [1, 1]} : vector<16x48xf32> to vector<8x48xf32>
    %c0_3 = arith.constant 0 : index
    %c0_4 = arith.constant 0 : index
    %c0_5 = arith.constant 0 : index
    %4 = vector.load %arg0[%c0_3, %c0_4, %c0_5] : memref<2x16x48xf32, #tpu.memory_space<vmem>>, vector<1x16x48xf32>
    %5 = vector.shape_cast %4 : vector<1x16x48xf32> to vector<16x48xf32>
    %cst_6 = arith.constant dense<0.000000e+00> : vector<8x16xf32>
    %6 = tpu.matmul %3, %5, %cst_6 {dimension_numbers = #tpu.dot_dimension_numbers<[1], [1], [0], [0], [0, 0, 1, 0], [], []>} : vector<8x48xf32>, vector<16x48xf32>, vector<8x16xf32> -> vector<8x16xf32>
    %c0_7 = arith.constant 0 : index
    %c0_8 = arith.constant 0 : index
    %7 = vector.load %arg2[%c0_7, %c0_8] : memref<2x16xf32, #tpu.memory_space<vmem>>, vector<1x16xf32>
    %8 = vector.broadcast %7 : vector<1x16xf32> to vector<8x16xf32>
    %9 = arith.addf %6, %8 : vector<8x16xf32>
    %cst_9 = arith.constant dense<0xFF800000> : vector<8xf32>
    %10 = vector.multi_reduction <maximumf>, %9, %cst_9 [1] : vector<8x16xf32> to vector<8xf32>
    %11 = vector.shape_cast %10 : vector<8xf32> to vector<8x1xf32>
    %12 = vector.broadcast %11 : vector<8x1xf32> to vector<8x16xf32>
    %13 = arith.subf %9, %12 : vector<8x16xf32>
    %14 = math.exp %13 : vector<8x16xf32>
    %cst_10 = arith.constant dense<0.000000e+00> : vector<8xf32>
    %15 = vector.multi_reduction <add>, %14, %cst_10 [1] : vector<8x16xf32> to vector<8xf32>
    %16 = vector.shape_cast %15 : vector<8xf32> to vector<8x1xf32>
    %17 = tpu.reciprocal %16 {approx = true} : vector<8x1xf32> -> vector<8x1xf32>
    %18 = vector.broadcast %17 : vector<8x1xf32> to vector<8x16xf32>
    %19 = arith.mulf %14, %18 : vector<8x16xf32>
    %c0_11 = arith.constant 0 : index
    %c0_12 = arith.constant 0 : index
    %c0_13 = arith.constant 0 : index
    %20 = vector.load %arg4[%c0_11, %c0_12, %c0_13] : memref<2x8x16xf32, #tpu.memory_space<vmem>>, vector<1x8x16xf32>
    %21 = vector.shape_cast %20 : vector<1x8x16xf32> to vector<8x16xf32>
    %22 = vector.shape_cast %19 : vector<8x16xf32> to vector<1x8x16xf32>
    tpu.vector_store %arg4[%c0_11, %c0_12, %c0_13], %22 {strides = array<i32>} : memref<2x8x16xf32, #tpu.memory_space<vmem>>, vector<1x8x16xf32>,
    %23 = vector.extract_strided_slice %2 {offsets = [8, 0], sizes = [8, 48], strides = [1, 1]} : vector<16x48xf32> to vector<8x48xf32>
    %c1 = arith.constant 1 : index
    %c0_14 = arith.constant 0 : index
    %c0_15 = arith.constant 0 : index
    %24 = vector.load %arg0[%c1, %c0_14, %c0_15] : memref<2x16x48xf32, #tpu.memory_space<vmem>>, vector<1x16x48xf32>
    %25 = vector.shape_cast %24 : vector<1x16x48xf32> to vector<16x48xf32>
    %cst_16 = arith.constant dense<0.000000e+00> : vector<8x16xf32>
    %26 = tpu.matmul %23, %25, %cst_16 {dimension_numbers = #tpu.dot_dimension_numbers<[1], [1], [0], [0], [0, 0, 1, 0], [], []>} : vector<8x48xf32>, vector<16x48xf32>, vector<8x16xf32> -> vector<8x16xf32>
    %c1_17 = arith.constant 1 : index
    %c0_18 = arith.constant 0 : index
    %27 = vector.load %arg2[%c1_17, %c0_18] : memref<2x16xf32, #tpu.memory_space<vmem>>, vector<1x16xf32>
    %28 = vector.broadcast %27 : vector<1x16xf32> to vector<8x16xf32>
    %29 = arith.addf %26, %28 : vector<8x16xf32>
    %cst_19 = arith.constant dense<0xFF800000> : vector<8xf32>
    %30 = vector.multi_reduction <maximumf>, %29, %cst_19 [1] : vector<8x16xf32> to vector<8xf32>
    %31 = vector.shape_cast %30 : vector<8xf32> to vector<8x1xf32>
    %32 = vector.broadcast %31 : vector<8x1xf32> to vector<8x16xf32>
    %33 = arith.subf %29, %32 : vector<8x16xf32>
    %34 = math.exp %33 : vector<8x16xf32>
    %cst_20 = arith.constant dense<0.000000e+00> : vector<8xf32>
    %35 = vector.multi_reduction <add>, %34, %cst_20 [1] : vector<8x16xf32> to vector<8xf32>
    %36 = vector.shape_cast %35 : vector<8xf32> to vector<8x1xf32>
    %37 = tpu.reciprocal %36 {approx = true} : vector<8x1xf32> -> vector<8x1xf32>
    %38 = vector.broadcast %37 : vector<8x1xf32> to vector<8x16xf32>
    %39 = arith.mulf %34, %38 : vector<8x16xf32>
    %c1_21 = arith.constant 1 : index
    %c0_22 = arith.constant 0 : index
    %c0_23 = arith.constant 0 : index
    %40 = vector.load %arg4[%c1_21, %c0_22, %c0_23] : memref<2x8x16xf32, #tpu.memory_space<vmem>>, vector<1x8x16xf32>
    %41 = vector.shape_cast %40 : vector<1x8x16xf32> to vector<8x16xf32>
    %42 = vector.shape_cast %39 : vector<8x16xf32> to vector<1x8x16xf32>
    tpu.vector_store %arg4[%c1_21, %c0_22, %c0_23], %42 {strides = array<i32>} : memref<2x8x16xf32, #tpu.memory_space<vmem>>, vector<1x8x16xf32>,
    return
  }
}

</mosaic_0001>

<llo_original>
// kernel: tpu_custom_call.1
$region0: #{tpu_custom_call.1}
  #allocation0 [shape = 'u32[]', space=smem, size = 0x4, offset = 0x4, fixed_abs, tag = 'smem constant byte address 0x4 - core index']
  #allocation1 [shape = 'u32[72,128]{1,0:T(1,128)}', space=vmem, size = 0x9000, scoped, tag = 'internal scratch']
  %s0 = inlined_call_operand.hbm [shape: f32[2,16,48], index: 0, kind: input, shape index: {}]
  %s1 = inlined_call_operand.hbm [shape: f32[16,32], index: 1, kind: input, shape index: {}]
  %s2 = inlined_call_operand.hbm [shape: f32[2,16], index: 2, kind: input, shape index: {}]
  %s3 = inlined_call_operand.hbm [shape: f32[32,48], index: 3, kind: input, shape index: {}]
  %s4 = inlined_call_operand.hbm [shape: f32[2,8,16], index: 4, kind: output, shape index: {}]
  %s5 = sld [smem:[#allocation0]]
  $region42: #{tpu_custom_call.1} parent=0
    _
  %s7 = ssub.s32 1, %s5
  %s8 = scalar_select 0, %s7, %s5
  $region1: #{tpu_custom_call.1} parent=0
    #allocation2 [shape = 'u8[16384]{0}', space=vmem, size = 0x4000, scoped, tag = 'input window, operand 0, single buffered']
    #allocation3 [shape = 's32[1]{0}', space=sflag, size = 0x4, scoped, tag = 'scoped memory for tpu_custom_call.1']
    #allocation4 [shape = 's32[1]{0}', space=sflag, size = 0x4, scoped, tag = 'scoped memory for tpu_custom_call.1']
    #allocation5 [shape = 'u8[8192]{0}', space=vmem, size = 0x2000, scoped, tag = 'input window, operand 1, single buffered']
    #allocation6 [shape = 's32[1]{0}', space=sflag, size = 0x4, scoped, tag = 'scoped memory for tpu_custom_call.1']
    #allocation7 [shape = 'u8[1024]{0}', space=vmem, size = 0x400, scoped, tag = 'input window, operand 2, single buffered']
    #allocation8 [shape = 'u8[16384]{0}', space=vmem, size = 0x4000, scoped, tag = 'input window, operand 3, single buffered']
    #allocation9 [shape = 's32[1]{0}', space=sflag, size = 0x4, scoped, tag = 'scoped memory for tpu_custom_call.1']
    #allocation10 [shape = 'u8[8192]{0}', space=vmem, size = 0x2000, scoped, tag = 'output window, operand 0, single buffered']
    %9 = vsyncpa [#allocation3], 0
    %10 = vsyncpa [#allocation6], 0
    %11 = vsyncpa [#allocation9], 0
    %12 = vsyncpa [#allocation4], 0
    // Predicated region
    $region2: #{tpu_custom_call.1} parent=1 // pred_check
      _
    $region3: #{tpu_custom_call.1} parent=1 // pred_check_branch
      %14 = sbr.rel (0) target = $region5
    $region4: #{tpu_custom_call.1} parent=1 // pred_region
      %16 = vsyncadd [#allocation3], 0
      %s17 = sshll.u32 %s0, 4
      %s18 = int_to_ptr.hbm [resolvable:$true] %s17
      %s19 = sshll.u32 [#allocation2], 4
      %s20 = int_to_ptr.vmem [resolvable:$true] %s19
      %25 = dma.hbm_to_vmem [thread:$0]  %s18, 512, %s20, [#allocation3], 128, 128, 8
    $region5: #{tpu_custom_call.1} parent=1 // pred_fallthru
      _
    // Predicated region
    $region6: #{tpu_custom_call.1} parent=1 // pred_check
      _
    $region7: #{tpu_custom_call.1} parent=1 // pred_check_branch
      %27 = sbr.rel (0) target = $region9
    $region8: #{tpu_custom_call.1} parent=1 // pred_region
      %29 = vsyncadd [#allocation6], 0
      %s30 = sshll.u32 %s1, 4
      %s31 = int_to_ptr.hbm [resolvable:$true] %s30
      %s32 = sshll.u32 [#allocation5], 4
      %s33 = int_to_ptr.vmem [resolvable:$true] %s32
      %38 = dma.hbm_to_vmem [thread:$0]  %s31, 256, %s33, [#allocation6], 128, 128, 8
    $region9: #{tpu_custom_call.1} parent=1 // pred_fallthru
      _
    // Predicated region
    $region10: #{tpu_custom_call.1} parent=1 // pred_check
      _
    $region11: #{tpu_custom_call.1} parent=1 // pred_check_branch
      %40 = sbr.rel (0) target = $region13
    $region12: #{tpu_custom_call.1} parent=1 // pred_region
      %42 = vsyncadd [#allocation6], 0
      %s44 = sshll.u32 %s2, 4
      %s45 = int_to_ptr.hbm [resolvable:$true] %s44
      %s46 = sshll.u32 [#allocation7], 4
      %s47 = int_to_ptr.vmem [resolvable:$true] %s46
      %49 = dma.hbm_to_vmem [thread:$0]  %s45, 32, %s47, [#allocation6]
    $region13: #{tpu_custom_call.1} parent=1 // pred_fallthru
      _
    // Predicated region
    $region14: #{tpu_custom_call.1} parent=1 // pred_check
      _
    $region15: #{tpu_custom_call.1} parent=1 // pred_check_branch
      %51 = sbr.rel (0) target = $region17
    $region16: #{tpu_custom_call.1} parent=1 // pred_region
      %53 = vsyncadd [#allocation9], 0
      %s54 = sshll.u32 %s3, 4
      %s55 = int_to_ptr.hbm [resolvable:$true] %s54
      %s56 = sshll.u32 [#allocation8], 4
      %s57 = int_to_ptr.vmem [resolvable:$true] %s56
      %62 = dma.hbm_to_vmem [thread:$0]  %s55, 512, %s57, [#allocation9], 128, 128, 8
    $region17: #{tpu_custom_call.1} parent=1 // pred_fallthru
      _
    // Predicated region
    $region18: #{tpu_custom_call.1} parent=1 // pred_check
      _
    $region19: #{tpu_custom_call.1} parent=1 // pred_check_branch
      %64 = sbr.rel (0) target = $region21
    $region20: #{tpu_custom_call.1} parent=1 // pred_region
      %66 = dma.done [#allocation3], 512
    $region21: #{tpu_custom_call.1} parent=1 // pred_fallthru
      _
    // Predicated region
    $region22: #{tpu_custom_call.1} parent=1 // pred_check
      _
    $region23: #{tpu_custom_call.1} parent=1 // pred_check_branch
      %68 = sbr.rel (0) target = $region25
    $region24: #{tpu_custom_call.1} parent=1 // pred_region
      %70 = dma.done [#allocation6], 256
    $region25: #{tpu_custom_call.1} parent=1 // pred_fallthru
      _
    // Predicated region
    $region26: #{tpu_custom_call.1} parent=1 // pred_check
      _
    $region27: #{tpu_custom_call.1} parent=1 // pred_check_branch
      %72 = sbr.rel (0) target = $region29
    $region28: #{tpu_custom_call.1} parent=1 // pred_region
      %74 = dma.done [#allocation6], 32
    $region29: #{tpu_custom_call.1} parent=1 // pred_fallthru
      _
    // Predicated region
    $region30: #{tpu_custom_call.1} parent=1 // pred_check
      _
    $region31: #{tpu_custom_call.1} parent=1 // pred_check_branch
      %76 = sbr.rel (0) target = $region33
    $region32: #{tpu_custom_call.1} parent=1 // pred_region
      %78 = dma.done [#allocation9], 512
    $region33: #{tpu_custom_call.1} parent=1 // pred_fallthru
      _
    %v79 = vld [vmem:[#allocation5] sm:$0xff]
    %v80 = vld [vmem:[#allocation5 + $0x8] sm:$0xff]
    %v81 = vld [vmem:[#allocation8] sm:$0xff]
    %v82 = vld [vmem:[#allocation8 + $0x8] sm:$0xff]
    %v83 = vld [vmem:[#allocation8 + $0x10] sm:$0xff]
    %v84 = vld [vmem:[#allocation8 + $0x18] sm:$0xff]
    %vm85 = vcmask 261120
    %v87 = vsel %vm85, %v79, 0
    %v90 = vsel %vm85, %v80, 0
    %92 = vmatpush.msra.mxu0 0.0
    %93 = vmatpush.msra.mxu0 0.0
    %94 = vmatpush.msra.mxu0 0.0
    %95 = vmatpush.msra.mxu0 0.0
    %96 = vmatpush.msra.mxu0 0.0
    %97 = vmatpush.msra.mxu0 0.0
    %98 = vmatpush.msra.mxu0 0.0
    %99 = vmatpush.msra.mxu0 0.0
    %100 = vmatpush.msra.mxu0 0.0
    %101 = vmatpush.msra.mxu0 0.0
    %102 = vmatpush.msra.mxu0 0.0
    %103 = vmatpush.msra.mxu0 0.0
    %104 = vmatpush.msra.mxu0 %v84
    %105 = vmatpush.msra.mxu0 %v83
    %106 = vmatpush.msra.mxu0 %v82
    %107 = vmatpush.msra.mxu0 %v81
    %108 = vmatmul.f32.gmra.mxu0 %v87
    %v109 = vpop.f32.mrf.mxu0
    %v110 = vadd.f32 0.0, %v109
    %111 = vmatmul.f32.gmra.mxu0 %v90
    %v112 = vpop.f32.mrf.mxu0
    %v113 = vadd.f32 0.0, %v112
    %114 = vdwg.mxu0
    %v115 = vld [vmem:[#allocation2] sm:$0xff]
    %v116 = vld [vmem:[#allocation2 + $0x8] sm:$0xff]
    %v117 = vld [vmem:[#allocation7] sm:$0x1]
    %v118 = vperm.slane %v117, 0
    %vm119 = vcmask 392192
    %v121 = vsel %vm119, %v110, 0
    %v124 = vsel %vm119, %v115, 0
    %v127 = vsel %vm119, %v116, 0
    %129 = vmatpush.xpose.msra.mxu0 0.0
    %130 = vmatpush.xpose.msra.mxu0 0.0
    %131 = vmatpush.xpose.msra.mxu0 0.0
    %132 = vmatpush.xpose.msra.mxu0 0.0
    %133 = vmatpush.xpose.msra.mxu0 0.0
    %134 = vmatpush.xpose.msra.mxu0 0.0
    %135 = vmatpush.xpose.msra.mxu0 0.0
    %136 = vmatpush.xpose.msra.mxu0 0.0
    %137 = vmatpush.xpose.msra.mxu0 0.0
    %138 = vmatpush.xpose.msra.mxu0 0.0
    %139 = vmatpush.xpose.msra.mxu0 0.0
    %140 = vmatpush.xpose.msra.mxu0 0.0
    %141 = vmatpush.xpose.msra.mxu0 0.0
    %142 = vmatpush.xpose.msra.mxu0 0.0
    %143 = vmatpush.xpose.msra.mxu0 %v127
    %144 = vmatpush.xpose.msra.mxu0 %v124
    %145 = vmatmul.f32.gmra.mxu0 %v121
    %v146 = vpop.f32.mrf.mxu0
    %v147 = vadd.f32 %v118, %v146
    %148 = vdwg.mxu0
    %vm149 = vcmask 130048
    %v150 = vsel %vm149, %v147, -inf
    %151 = vmax.xlane.f32.xlu0 %v150
    %v152 = vpop.xlane.xlu0 %151
    %v153 = vsub.f32 %v147, %v152
    %v154 = vmul.f32 %v153, 1.442695
    %v155 = vpow.pop %v154
    %v156 = vsel %vm149, %v155, 0.0
    %157 = vadd.xlane.f32.xlu0 %v156
    %v158 = vpop.xlane.xlu0 %157
    %v159 = vrcp.pop %v158
    %v160 = vmul.f32 %v155, %v159
    %161 = vst.msk [vmem:[#allocation10] sm:$0xff] %vm149, %v160
    %s162 = scalar_lea.vmem [#allocation2], 16
    %v163 = vld [vmem:[%s162] sm:$0xff]
    %v164 = vld [vmem:[%s162 + $0x8] sm:$0xff]
    %v165 = vld [vmem:[#allocation7 + $0x1] sm:$0x1]
    %v166 = vperm.slane %v165, 0
    %v168 = vsel %vm119, %v113, 0
    %v171 = vsel %vm119, %v163, 0
    %v174 = vsel %vm119, %v164, 0
    %176 = vmatpush.xpose.msra.mxu0 0.0
    %177 = vmatpush.xpose.msra.mxu0 0.0
    %178 = vmatpush.xpose.msra.mxu0 0.0
    %179 = vmatpush.xpose.msra.mxu0 0.0
    %180 = vmatpush.xpose.msra.mxu0 0.0
    %181 = vmatpush.xpose.msra.mxu0 0.0
    %182 = vmatpush.xpose.msra.mxu0 0.0
    %183 = vmatpush.xpose.msra.mxu0 0.0
    %184 = vmatpush.xpose.msra.mxu0 0.0
    %185 = vmatpush.xpose.msra.mxu0 0.0
    %186 = vmatpush.xpose.msra.mxu0 0.0
    %187 = vmatpush.xpose.msra.mxu0 0.0
    %188 = vmatpush.xpose.msra.mxu0 0.0
    %189 = vmatpush.xpose.msra.mxu0 0.0
    %190 = vmatpush.xpose.msra.mxu0 %v174
    %191 = vmatpush.xpose.msra.mxu0 %v171
    %192 = vmatmul.f32.gmra.mxu0 %v168
    %v193 = vpop.f32.mrf.mxu0
    %v194 = vadd.f32 %v166, %v193
    %195 = vdwg.mxu0
    %v196 = vsel %vm149, %v194, -inf
    %197 = vmax.xlane.f32.xlu0 %v196
    %v198 = vpop.xlane.xlu0 %197
    %v199 = vsub.f32 %v194, %v198
    %v200 = vmul.f32 %v199, 1.442695
    %v201 = vpow.pop %v200
    %v202 = vsel %vm149, %v201, 0.0
    %203 = vadd.xlane.f32.xlu0 %v202
    %v204 = vpop.xlane.xlu0 %203
    %v205 = vrcp.pop %v204
    %v206 = vmul.f32 %v201, %v205
    %s207 = scalar_lea.vmem [#allocation10], 8
    %208 = vst.msk [vmem:[%s207] sm:$0xff] %vm149, %v206
    // Predicated region
    $region34: #{tpu_custom_call.1} parent=1 // pred_check
      _
    $region35: #{tpu_custom_call.1} parent=1 // pred_check_branch
      %210 = sbr.rel (0) target = $region37
    $region36: #{tpu_custom_call.1} parent=1 // pred_region
      %212 = vsyncadd [#allocation4], 0
      %s213 = sshll.u32 [#allocation10], 4
      %s214 = int_to_ptr.vmem [resolvable:$true] %s213
      %s215 = sshll.u32 %s4, 4
      %s216 = int_to_ptr.hbm [resolvable:$true] %s215
      %221 = dma.vmem_to_hbm [thread:$0]  %s214, 256, %s216, [#allocation4], 128, 128, 8
    $region37: #{tpu_custom_call.1} parent=1 // pred_fallthru
      _
    // Predicated region
    $region38: #{tpu_custom_call.1} parent=1 // pred_check
      _
    $region39: #{tpu_custom_call.1} parent=1 // pred_check_branch
      %223 = sbr.rel (0) target = $region41
    $region40: #{tpu_custom_call.1} parent=1 // pred_region
      %225 = dma.done [#allocation4], 256
    $region41: #{tpu_custom_call.1} parent=1 // pred_fallthru
      _
    %226 = vsyncpa [#allocation3], 1
    %227 = vsyncpa [#allocation6], 1
    %228 = vsyncpa [#allocation9], 1
    %229 = vsyncpa [#allocation4], 1

</llo_original>
